<compile_context>
chip_gen: v7x
topology: tpu7x:2x2x1
jax: 0.10.0
libtpu: 0.0.40
codegen_flags: <defaults>
</compile_context>

<pallas_src>
import jax
import jax.numpy as jnp
from jax import lax
from jax.experimental import pallas as pl
from jax.experimental.pallas import tpu as pltpu


def _round_up(x, m):
    return ((x + m - 1) // m) * m


def _mlm_kernel(x_ref, w_ref, b_ref, o_ref, m_sc, l_sc):
    """One (row-tile i, vocab-tile j) grid step.

    x_ref : (tm, H)   activations (compute dtype, e.g. bf16)
    w_ref : (tv, H)   nn.Linear weight slice in PyTorch [V, H] layout
    b_ref : (1, tv)   bias slice (f32)
    o_ref : (tm, Vp)  output block, VMEM-resident across all vocab tiles
    m_sc  : (tm, 1)   running row max (f32)
    l_sc  : (tm, 1)   running row sum-of-exp (f32)
    """
    j = pl.program_id(1)
    nv = pl.num_programs(1)
    tv = b_ref.shape[-1]

    @pl.when(j == 0)
    def _():
        m_sc[...] = jnp.full_like(m_sc, -jnp.inf)
        l_sc[...] = jnp.zeros_like(l_sc)

    # "NT" contraction: (tm, H) x (tv, H) -> (tm, tv); no transposed weight copy.
    logits = lax.dot_general(
        x_ref[...], w_ref[...],
        dimension_numbers=(((1,), (1,)), ((), ())),
        preferred_element_type=jnp.float32,
    ) + b_ref[...]

    # Online log-sum-exp across vocab tiles (all f32).
    m_old = m_sc[...]
    m_new = jnp.maximum(m_old, jnp.max(logits, axis=-1, keepdims=True))
    l_sc[...] = l_sc[...] * jnp.exp(m_old - m_new) + jnp.sum(
        jnp.exp(logits - m_new), axis=-1, keepdims=True)
    m_sc[...] = m_new

    # Stash raw logits into the resident output block (lane-dense 128-mult cols).
    col = pl.multiple_of(j * tv, 128)
    o_ref[:, pl.ds(col, tv)] = logits.astype(o_ref.dtype)

    # Last vocab tile: normalize the whole row block in place.
    @pl.when(j == nv - 1)
    def _():
        lse = m_sc[...] + jnp.log(l_sc[...])
        o_ref[...] = (o_ref[...].astype(jnp.float32) - lse).astype(o_ref.dtype)


def masked_language_model(x, weight, bias, *, tm=256, tv=512,
                          compute_dtype=jnp.bfloat16,
                          out_dtype=jnp.float32):
    """y = log_softmax(x @ weight.T + bias, axis=-1).transpose(0, 1)

    x: [B, S, H]; weight: [V, H] (PyTorch nn.Linear layout); bias: [V].
    Returns [S, B, V].
    """
    B, S, H = x.shape
    V, H_w = weight.shape
    assert H_w == H

    # Transpose the *small* input side (M x H) so the output is already [S, B, V].
    M = S * B
    x2d = jnp.transpose(x, (1, 0, 2)).reshape(M, H).astype(compute_dtype)
    # bf16 MXU operands halve the dominant weight DMA (ideally stored bf16 upstream).
    w = weight.astype(compute_dtype)
    b = bias.astype(jnp.float32)

    # Row tile: multiple of 16 (bf16 sublane pack); vocab tile: multiple of 128.
    tm = max(16, min(tm, _round_up(M, 16)))
    tv = max(128, min(tv, _round_up(V, 128)))

    Mp = _round_up(M, tm)
    Vp = _round_up(V, tv)
    if Mp != M:
        x2d = jnp.pad(x2d, ((0, Mp - M), (0, 0)))
    if Vp != V:
        w = jnp.pad(w, ((0, Vp - V), (0, 0)))
        # Huge negative bias -> padded vocab columns contribute 0 to the LSE.
        b = jnp.pad(b, (0, Vp - V), constant_values=-1e30)
    b2d = b.reshape(1, Vp)

    grid = (Mp // tm, Vp // tv)

    out = pl.pallas_call(
        _mlm_kernel,
        out_shape=jax.ShapeDtypeStruct((Mp, Vp), out_dtype),
        grid_spec=pltpu.PrefetchScalarGridSpec(
            num_scalar_prefetch=0,
            grid=grid,
            in_specs=[
                pl.BlockSpec((tm, H), lambda i, j: (i, 0)),   # activations (const in j)
                pl.BlockSpec((tv, H), lambda i, j: (j, 0)),   # weight vocab-tile
                pl.BlockSpec((1, tv), lambda i, j: (0, j)),   # bias vocab-tile
            ],
            out_specs=pl.BlockSpec((tm, Vp), lambda i, j: (i, 0)),  # resident over j
            scratch_shapes=[
                pltpu.VMEM((tm, 1), jnp.float32),   # running max
                pltpu.VMEM((tm, 1), jnp.float32),   # running sum-of-exp
            ],
        ),
        compiler_params=pltpu.CompilerParams(
            dimension_semantics=("parallel", "arbitrary"),
            vmem_limit_bytes=48 * 1024 * 1024,   # safe on v7x (64 MiB) and v5e/v6e
        ),
    )(x2d, w, b2d)

    # Drop row/vocab padding; already [S, B, V] order -- no output transpose.
    return out[:M, :V].reshape(S, B, V)


if __name__ == "__main__":
    # Small shapes: batch=2, seq=8, hidden=128, vocab=512 (4 vocab tiles at tv=128).
    B, S, H, V = 2, 8, 128, 512
    key = jax.random.PRNGKey(0)
    kx, kw, kb = jax.random.split(key, 3)

    x = jax.random.normal(kx, (B, S, H), dtype=jnp.float32)
    weight = jax.random.normal(kw, (V, H), dtype=jnp.float32) * 0.02   # nn.Linear [V, H]
    bias = jax.random.normal(kb, (V,), dtype=jnp.float32) * 0.02

    out = masked_language_model(x, weight, bias, tm=256, tv=128)
    jax.block_until_ready(out)

    # Reference in plain JAX (f32, highest precision matmul).
    ref_logits = jnp.dot(x, weight.T, precision=lax.Precision.HIGHEST) + bias
    ref = jax.nn.log_softmax(ref_logits, axis=-1)
    ref = jnp.transpose(ref, (1, 0, 2))

    assert out.shape == (S, B, V), out.shape
    # bf16 MXU operands -> loose-but-meaningful tolerance vs the f32 reference.
    max_err = float(jnp.max(jnp.abs(out - ref)))
    assert jnp.allclose(out, ref, atol=3e-2, rtol=3e-2), max_err

    print("KERNEL_OK")
</pallas_src>

<mosaic_0001>
module attributes {stable_mosaic.version = 11 : i64} {
  func.func @_mlm_kernel(%arg0: i32, %arg1: i32, %arg2: memref<16x128xbf16, #tpu.memory_space<vmem>>, %arg3: memref<128x128xbf16, #tpu.memory_space<vmem>>, %arg4: memref<1x128xf32, #tpu.memory_space<vmem>>, %arg5: memref<16x512xf32, #tpu.memory_space<vmem>>, %arg6: memref<16x1xf32, #tpu.memory_space<vmem>>, %arg7: memref<16x1xf32, #tpu.memory_space<vmem>>) attributes {dimension_semantics = [#tpu.dimension_semantics<parallel>, #tpu.dimension_semantics<arbitrary>], iteration_bounds = array<i64: 1, 4>, scalar_prefetch = 0 : i64, scratch_operands = 2 : i64, tpu.core_type = #tpu.core_type<tc>, window_params = [{transform_indices = @transform_0, window_bounds = array<i64: 16, 128>}, {transform_indices = @transform_1, window_bounds = array<i64: 128, 128>}, {transform_indices = @transform_2, window_bounds = array<i64: 1, 128>}, {transform_indices = @transform_3, window_bounds = array<i64: 16, 512>}]} {
    %c0_i32 = arith.constant 0 : i32
    %0 = arith.cmpi eq, %arg1, %c0_i32 : i32
    %1 = arith.extui %0 : i1 to i32
    %c0_i32_0 = arith.constant 0 : i32
    %2 = arith.cmpi ne, %1, %c0_i32_0 : i32
    scf.if %2 {
      %cst_18 = arith.constant 0xFF800000 : f32
      %32 = vector.broadcast %cst_18 : f32 to vector<16x1xf32>
      %c0_19 = arith.constant 0 : index
      %c0_20 = arith.constant 0 : index
      %33 = vector.load %arg6[%c0_19, %c0_20] : memref<16x1xf32, #tpu.memory_space<vmem>>, vector<16x1xf32>
      tpu.vector_store %arg6[%c0_19, %c0_20], %32 {strides = array<i32>} : memref<16x1xf32, #tpu.memory_space<vmem>>, vector<16x1xf32>,
      %cst_21 = arith.constant 0.000000e+00 : f32
      %34 = vector.broadcast %cst_21 : f32 to vector<16x1xf32>
      %c0_22 = arith.constant 0 : index
      %c0_23 = arith.constant 0 : index
      %35 = vector.load %arg7[%c0_22, %c0_23] : memref<16x1xf32, #tpu.memory_space<vmem>>, vector<16x1xf32>
      tpu.vector_store %arg7[%c0_22, %c0_23], %34 {strides = array<i32>} : memref<16x1xf32, #tpu.memory_space<vmem>>, vector<16x1xf32>,
    } else {
    }
    %c0 = arith.constant 0 : index
    %c0_1 = arith.constant 0 : index
    %3 = vector.load %arg2[%c0, %c0_1] : memref<16x128xbf16, #tpu.memory_space<vmem>>, vector<16x128xbf16>
    %c0_2 = arith.constant 0 : index
    %c0_3 = arith.constant 0 : index
    %4 = vector.load %arg3[%c0_2, %c0_3] : memref<128x128xbf16, #tpu.memory_space<vmem>>, vector<128x128xbf16>
    %cst = arith.constant dense<0.000000e+00> : vector<16x128xf32>
    %5 = tpu.matmul %3, %4, %cst {dimension_numbers = #tpu.dot_dimension_numbers<[1], [1], [0], [0], [0, 0, 1, 0], [], []>} : vector<16x128xbf16>, vector<128x128xbf16>, vector<16x128xf32> -> vector<16x128xf32>
    %c0_4 = arith.constant 0 : index
    %c0_5 = arith.constant 0 : index
    %6 = vector.load %arg4[%c0_4, %c0_5] : memref<1x128xf32, #tpu.memory_space<vmem>>, vector<1x128xf32>
    %7 = vector.broadcast %6 : vector<1x128xf32> to vector<16x128xf32>
    %8 = arith.addf %5, %7 : vector<16x128xf32>
    %c0_6 = arith.constant 0 : index
    %c0_7 = arith.constant 0 : index
    %9 = vector.load %arg6[%c0_6, %c0_7] : memref<16x1xf32, #tpu.memory_space<vmem>>, vector<16x1xf32>
    %cst_8 = arith.constant dense<0xFF800000> : vector<16xf32>
    %10 = vector.multi_reduction <maximumf>, %8, %cst_8 [1] : vector<16x128xf32> to vector<16xf32>
    %11 = vector.shape_cast %10 : vector<16xf32> to vector<16x1xf32>
    %12 = arith.maximumf %9, %11 : vector<16x1xf32>
    %c0_9 = arith.constant 0 : index
    %c0_10 = arith.constant 0 : index
    %13 = vector.load %arg7[%c0_9, %c0_10] : memref<16x1xf32, #tpu.memory_space<vmem>>, vector<16x1xf32>
    %14 = arith.subf %9, %12 : vector<16x1xf32>
    %15 = math.exp %14 : vector<16x1xf32>
    %16 = arith.mulf %13, %15 : vector<16x1xf32>
    %17 = vector.broadcast %12 : vector<16x1xf32> to vector<16x128xf32>
    %18 = arith.subf %8, %17 : vector<16x128xf32>
    %19 = math.exp %18 : vector<16x128xf32>
    %cst_11 = arith.constant dense<0.000000e+00> : vector<16xf32>
    %20 = vector.multi_reduction <add>, %19, %cst_11 [1] : vector<16x128xf32> to vector<16xf32>
    %21 = vector.shape_cast %20 : vector<16xf32> to vector<16x1xf32>
    %22 = arith.addf %16, %21 : vector<16x1xf32>
    %c0_12 = arith.constant 0 : index
    %c0_13 = arith.constant 0 : index
    %23 = vector.load %arg7[%c0_12, %c0_13] : memref<16x1xf32, #tpu.memory_space<vmem>>, vector<16x1xf32>
    tpu.vector_store %arg7[%c0_12, %c0_13], %22 {strides = array<i32>} : memref<16x1xf32, #tpu.memory_space<vmem>>, vector<16x1xf32>,
    %c0_14 = arith.constant 0 : index
    %c0_15 = arith.constant 0 : index
    %24 = vector.load %arg6[%c0_14, %c0_15] : memref<16x1xf32, #tpu.memory_space<vmem>>, vector<16x1xf32>
    tpu.vector_store %arg6[%c0_14, %c0_15], %12 {strides = array<i32>} : memref<16x1xf32, #tpu.memory_space<vmem>>, vector<16x1xf32>,
    %c128_i32 = arith.constant 128 : i32
    %25 = arith.muli %arg1, %c128_i32 : i32
    %26 = tpu.assume_multiple %25, 128 : i32
    %c0_16 = arith.constant 0 : index
    %27 = arith.index_cast %26 : i32 to index
    %28 = vector.load %arg5[%c0_16, %27] : memref<16x512xf32, #tpu.memory_space<vmem>>, vector<16x128xf32>
    tpu.vector_store %arg5[%c0_16, %27], %8 {strides = array<i32>} : memref<16x512xf32, #tpu.memory_space<vmem>>, vector<16x128xf32>,
    %c3_i32 = arith.constant 3 : i32
    %29 = arith.cmpi eq, %arg1, %c3_i32 : i32
    %30 = arith.extui %29 : i1 to i32
    %c0_i32_17 = arith.constant 0 : i32
    %31 = arith.cmpi ne, %30, %c0_i32_17 : i32
    scf.if %31 {
      %c0_18 = arith.constant 0 : index
      %c0_19 = arith.constant 0 : index
      %32 = vector.load %arg6[%c0_18, %c0_19] : memref<16x1xf32, #tpu.memory_space<vmem>>, vector<16x1xf32>
      %c0_20 = arith.constant 0 : index
      %c0_21 = arith.constant 0 : index
      %33 = vector.load %arg7[%c0_20, %c0_21] : memref<16x1xf32, #tpu.memory_space<vmem>>, vector<16x1xf32>
      %34 = math.log %33 : vector<16x1xf32>
      %35 = arith.addf %32, %34 : vector<16x1xf32>
      %c0_22 = arith.constant 0 : index
      %c0_23 = arith.constant 0 : index
      %36 = vector.load %arg5[%c0_22, %c0_23] : memref<16x512xf32, #tpu.memory_space<vmem>>, vector<16x512xf32>
      %37 = vector.broadcast %35 : vector<16x1xf32> to vector<16x512xf32>
      %38 = arith.subf %36, %37 : vector<16x512xf32>
      %c0_24 = arith.constant 0 : index
      %c0_25 = arith.constant 0 : index
      %39 = vector.load %arg5[%c0_24, %c0_25] : memref<16x512xf32, #tpu.memory_space<vmem>>, vector<16x512xf32>
      tpu.vector_store %arg5[%c0_24, %c0_25], %38 {strides = array<i32>} : memref<16x512xf32, #tpu.memory_space<vmem>>, vector<16x512xf32>,
    } else {
    }
    return
  }
  func.func @transform_0(%arg0: i32, %arg1: i32) -> (i32, i32) {
    %c0_i32 = arith.constant 0 : i32
    %c0_i32_0 = arith.constant 0 : i32
    return %arg0, %c0_i32 : i32, i32
  }
  func.func @transform_1(%arg0: i32, %arg1: i32) -> (i32, i32) {
    %c0_i32 = arith.constant 0 : i32
    %c0_i32_0 = arith.constant 0 : i32
    return %arg1, %c0_i32 : i32, i32
  }
  func.func @transform_2(%arg0: i32, %arg1: i32) -> (i32, i32) {
    %c0_i32 = arith.constant 0 : i32
    %c0_i32_0 = arith.constant 0 : i32
    return %c0_i32, %arg1 : i32, i32
  }
  func.func @transform_3(%arg0: i32, %arg1: i32) -> (i32, i32) {
    %c0_i32 = arith.constant 0 : i32
    %c0_i32_0 = arith.constant 0 : i32
    return %arg0, %c0_i32 : i32, i32
  }
}

</mosaic_0001>

<llo_original>
// kernel: tpu_custom_call.1
$region0: #{tpu_custom_call.1}
  #allocation0 [shape = 'u32[]', space=smem, size = 0x4, offset = 0x4, fixed_abs, tag = 'smem constant byte address 0x4 - core index']
  #allocation1 [shape = 'u32[144,128]{1,0:T(1,128)}', space=vmem, size = 0x12000, scoped, tag = 'internal scratch']
  #allocation2 [shape = 'f32[16,1]{1,0:T(8,128)}', space=vmem, size = 0x2000, scoped, tag = 'scratch operand']
  #allocation3 [shape = 'f32[16,1]{1,0:T(8,128)}', space=vmem, size = 0x2000, scoped, tag = 'scratch operand']
  %s0 = inlined_call_operand.hbm [shape: bf16[16,128], index: 0, kind: input, shape index: {}]
  %s1 = inlined_call_operand.hbm [shape: bf16[512,128], index: 1, kind: input, shape index: {}]
  %s2 = inlined_call_operand.vmem [shape: f32[1,512], index: 2, kind: input, shape index: {}]
  %s3 = inlined_call_operand.hbm [shape: f32[16,512], index: 3, kind: output, shape index: {}]
  %s4 = sld [smem:[#allocation0]]
  $region61: #{tpu_custom_call.1} parent=0
    _
  %s6 = ssub.s32 1, %s4
  %s7 = scalar_select 0, %s6, %s4
  $region1: #{tpu_custom_call.1} parent=0
    #allocation4 [shape = 'u8[4096]{0}', space=vmem, size = 0x1000, scoped, tag = 'input window, operand 0, single buffered']
    #allocation5 [shape = 's32[2]{0}', space=sflag, size = 0x8, scoped, tag = 'scoped memory for tpu_custom_call.1']
    #allocation6 [shape = 's32[2]{0}', space=sflag, size = 0x8, scoped, tag = 'scoped memory for tpu_custom_call.1']
    #allocation7 [shape = 'u8[65536]{0}', space=vmem, size = 0x10000, scoped, tag = 'input window, operand 1']
    #allocation8 [shape = 's32[2]{0}', space=sflag, size = 0x8, scoped, tag = 'scoped memory for tpu_custom_call.1']
    #allocation9 [shape = 'u8[32768]{0}', space=vmem, size = 0x8000, scoped, tag = 'output window, operand 0, single buffered']
    %8 = vsyncpa [#allocation5], 0
    %9 = vsyncpa [#allocation8], 0
    %s10 = scalar_lea.sflag [#allocation8], 1
    %11 = vsyncpa %s10, 0
    %12 = vsyncpa [#allocation6], 0
    loop: start=0, step=1, limit=6
    $region2: #{tpu_custom_call.1} parent=1 // loop_pre_header
      _
    $region3: #{tpu_custom_call.1} parent=1 // loop_header
      %s14 = sphi 0, %s18
      %p15 = scmp.ge.s32.totalorder %s14, 6
      %s21 = sphi 0, %s33
      %s22 = sphi 0, %s29
      %s23 = sphi 0, %s21
      %s24 = sphi 0, %s22
      %s25 = sphi 0, %s23
      %s26 = sphi 0, %s24
      %s36 = sphi 0, %s38
      %s39 = sphi 0, %s36
      %s40 = sphi 0, %s39
      %s56 = sphi 0, %s40
      %s62 = sphi 0, %s64
      %s65 = sphi 0, %s62
      %s66 = sphi 0, %s65
      %s82 = sphi 0, %s66
      %s88 = sphi 0, %s90
      %s91 = sphi 0, %s88
      %s92 = sphi 0, %s91
      %s108 = sphi 0, %s92
      %s114 = sphi 0, %s116
      %s117 = sphi 0, %s114
      %s118 = sphi 0, %s117
      %s134 = sphi 0, %s118
    $region4: #{tpu_custom_call.1} parent=1 // loop_header_branch
      %17 = sbr.rel (%p15) target = $region8
    $region5: #{tpu_custom_call.1} parent=1 // loop_body
      %s19 = ssub.s32 %s14, 1
      %s20 = ssub.s32 %s14, 2
      %s27 = sadd.s32 1, %s22
      %p28 = scmp.ge.s32.totalorder %s27, 4
      %s29 = scalar_select %p28, 0, %s27
      %s30 = sadd.s32 1, %s21
      %s31 = scalar_select %p28, %s30, %s21
      %p32 = scmp.ge.s32.totalorder %s31, 1
      %s33 = scalar_select %p32, 0, %s31
      %s34 = ssub.s32 %s21, %s33
      %p35 = scmp.eq.s32.totalorder %s34, 0
      %s37 = sadd.s32 %s36, 1
      %s38 = scalar_select %p35, %s36, %s37
      %p41 = pneg %p35
      %p42 = scmp.eq.s32.totalorder %s14, 3
      %p43 = por %p41, %p42
      %p44 = scmp.ne.s32.totalorder %s36, %s39
      %p45 = scmp.eq.s32.totalorder %s14, 0
      %p46 = por %p44, %p45
      %p47 = scmp.ne.s32.totalorder %s36, %s39
      %p48 = scmp.eq.s32.totalorder %s19, 3
      %p49 = por %p47, %p48
      %p50 = scmp.ne.s32.totalorder %s39, %s40
      %p51 = scmp.eq.s32.totalorder %s19, 0
      %p52 = por %p50, %p51
      %p53 = scmp.ne.s32.totalorder %s39, %s40
      %p54 = scmp.eq.s32.totalorder %s20, 3
      %p55 = por %p53, %p54
      %p57 = scmp.ne.s32.totalorder %s40, %s56
      %p58 = scmp.eq.s32.totalorder %s20, 0
      %p59 = por %p57, %p58
      %s60 = ssub.s32 %s22, %s29
      %p61 = scmp.eq.s32.totalorder %s60, 0
      %s63 = sadd.s32 %s62, 1
      %s64 = scalar_select %p61, %s62, %s63
      %p67 = pneg %p61
      %p68 = scmp.eq.s32.totalorder %s14, 3
      %p69 = por %p67, %p68
      %p70 = scmp.ne.s32.totalorder %s62, %s65
      %p71 = scmp.eq.s32.totalorder %s14, 0
      %p72 = por %p70, %p71
      %p73 = scmp.ne.s32.totalorder %s62, %s65
      %p74 = scmp.eq.s32.totalorder %s19, 3
      %p75 = por %p73, %p74
      %p76 = scmp.ne.s32.totalorder %s65, %s66
      %p77 = scmp.eq.s32.totalorder %s19, 0
      %p78 = por %p76, %p77
      %p79 = scmp.ne.s32.totalorder %s65, %s66
      %p80 = scmp.eq.s32.totalorder %s20, 3
      %p81 = por %p79, %p80
      %p83 = scmp.ne.s32.totalorder %s66, %s82
      %p84 = scmp.eq.s32.totalorder %s20, 0
      %p85 = por %p83, %p84
      %s86 = ssub.s32 %s22, %s29
      %p87 = scmp.eq.s32.totalorder %s86, 0
      %s89 = sadd.s32 %s88, 1
      %s90 = scalar_select %p87, %s88, %s89
      %p93 = pneg %p87
      %p94 = scmp.eq.s32.totalorder %s14, 3
      %p95 = por %p93, %p94
      %p96 = scmp.ne.s32.totalorder %s88, %s91
      %p97 = scmp.eq.s32.totalorder %s14, 0
      %p98 = por %p96, %p97
      %p99 = scmp.ne.s32.totalorder %s88, %s91
      %p100 = scmp.eq.s32.totalorder %s19, 3
      %p101 = por %p99, %p100
      %p102 = scmp.ne.s32.totalorder %s91, %s92
      %p103 = scmp.eq.s32.totalorder %s19, 0
      %p104 = por %p102, %p103
      %p105 = scmp.ne.s32.totalorder %s91, %s92
      %p106 = scmp.eq.s32.totalorder %s20, 3
      %p107 = por %p105, %p106
      %p109 = scmp.ne.s32.totalorder %s92, %s108
      %p110 = scmp.eq.s32.totalorder %s20, 0
      %p111 = por %p109, %p110
      %s112 = ssub.s32 %s21, %s33
      %p113 = scmp.eq.s32.totalorder %s112, 0
      %s115 = sadd.s32 %s114, 1
      %s116 = scalar_select %p113, %s114, %s115
      %p119 = pneg %p113
      %p120 = scmp.eq.s32.totalorder %s14, 3
      %p121 = por %p119, %p120
      %p122 = scmp.ne.s32.totalorder %s114, %s117
      %p123 = scmp.eq.s32.totalorder %s14, 0
      %p124 = por %p122, %p123
      %p125 = scmp.ne.s32.totalorder %s114, %s117
      %p126 = scmp.eq.s32.totalorder %s19, 3
      %p127 = por %p125, %p126
      %p128 = scmp.ne.s32.totalorder %s117, %s118
      %p129 = scmp.eq.s32.totalorder %s19, 0
      %p130 = por %p128, %p129
      %p131 = scmp.ne.s32.totalorder %s117, %s118
      %p132 = scmp.eq.s32.totalorder %s20, 3
      %p133 = por %p131, %p132
      %p135 = scmp.ne.s32.totalorder %s118, %s134
      %p136 = scmp.eq.s32.totalorder %s20, 0
      %p137 = por %p135, %p136
      %p138 = scmp.le.s32.totalorder 1, %s14
      %p139 = scmp.lt.s32.totalorder %s14, 5
      %p140 = pnand %p138, %p139
      %p141 = pneg %p140
      // Predicated region
      $region9: #{tpu_custom_call.1} parent=5 // pred_check
        _
      $region10: #{tpu_custom_call.1} parent=5 // pred_check_branch
        %143 = sbr.rel (%p140) target = $region12
      $region11: #{tpu_custom_call.1} parent=5 // pred_region
        %s144 = ssub.s32 %s14, 1
        // Predicated region
        $region13: #{tpu_custom_call.1} parent=11 // pred_check
          %p145 = pneg %p52
        $region14: #{tpu_custom_call.1} parent=11 // pred_check_branch
          %147 = sbr.rel (%p145) target = $region16
        $region15: #{tpu_custom_call.1} parent=11 // pred_region
          %s148 = smul.u32 2, %s23
          %s150 = ssub.s32 128, 128
          %151 = vsyncadd [#allocation5], %s150
          %s152 = smul.addr %s148, 64
          %s153 = scalar_lea.hbm %s0, %s152
          %s154 = sshll.u32 [#allocation4], 4
          %s155 = int_to_ptr.vmem [resolvable:$true] %s154
          %160 = dma.hbm_to_vmem [thread:$0]  %s153, 128, %s155, [#allocation5], 64, 64, 4
        $region16: #{tpu_custom_call.1} parent=11 // pred_fallthru
          _
      $region12: #{tpu_custom_call.1} parent=5 // pred_fallthru
        _
      %p161 = scmp.lt.s32.totalorder %s14, 4
      // Predicated region
      $region17: #{tpu_custom_call.1} parent=5 // pred_check
        %p162 = pneg %p161
      $region18: #{tpu_custom_call.1} parent=5 // pred_check_branch
        %164 = sbr.rel (%p162) target = $region20
      $region19: #{tpu_custom_call.1} parent=5 // pred_region
        // Predicated region
        $region21: #{tpu_custom_call.1} parent=19 // pred_check
          %p165 = pneg %p72
        $region22: #{tpu_custom_call.1} parent=19 // pred_check_branch
          %167 = sbr.rel (%p165) target = $region24
        $region23: #{tpu_custom_call.1} parent=19 // pred_region
          %s168 = sand.u32 %s62, 1
          %s169 = scalar_lea.sflag [#allocation8], %s168
          %s170 = sand.u32 %s62, 1
          %s171 = smul.addr %s170, 64
          %s172 = scalar_lea.vmem [#allocation7], %s171
          %s173 = smul.u32 16, %s22
          %s175 = ssub.s32 1024, 1024
          %176 = vsyncadd %s169, %s175
          %s177 = smul.addr %s173, 64
          %s178 = scalar_lea.hbm %s1, %s177
          %s179 = sshll.u32 %s172, 4
          %s180 = int_to_ptr.vmem [resolvable:$true] %s179
          %185 = dma.hbm_to_vmem [thread:$0]  %s178, 1024, %s180, %s169, 64, 64, 4
        $region24: #{tpu_custom_call.1} parent=19 // pred_fallthru
          _
        // Predicated region
        $region25: #{tpu_custom_call.1} parent=19 // pred_check
          %p186 = pneg %p98
        $region26: #{tpu_custom_call.1} parent=19 // pred_check_branch
          %188 = sbr.rel (%p186) target = $region28
        $region27: #{tpu_custom_call.1} parent=19 // pred_region
          %p189 = scmp.lt.s32.totalorder %s22, 3
          %s190 = scalar_select %p189, %s22, 3
          %s191 = scalar_lea.vmem %s2, %s190
        $region28: #{tpu_custom_call.1} parent=19 // pred_fallthru
          _
      $region20: #{tpu_custom_call.1} parent=5 // pred_fallthru
        _
      %p192 = scmp.le.s32.totalorder 1, %s14
      %p193 = scmp.lt.s32.totalorder %s14, 5
      %p194 = pnand %p192, %p193
      %p195 = pneg %p194
      // Predicated region
      $region29: #{tpu_custom_call.1} parent=5 // pred_check
        _
      $region30: #{tpu_custom_call.1} parent=5 // pred_check_branch
        %197 = sbr.rel (%p194) target = $region32
      $region31: #{tpu_custom_call.1} parent=5 // pred_region
        %s198 = ssub.s32 %s14, 1
        // Predicated region
        $region33: #{tpu_custom_call.1} parent=31 // pred_check
          %p199 = pneg %p52
        $region34: #{tpu_custom_call.1} parent=31 // pred_check_branch
          %201 = sbr.rel (%p199) target = $region36
        $region35: #{tpu_custom_call.1} parent=31 // pred_region
          %202 = dma.done [#allocation5], 128
        $region36: #{tpu_custom_call.1} parent=31 // pred_fallthru
          _
        %s203 = sand.u32 %s65, 1
        %s204 = scalar_lea.sflag [#allocation8], %s203
        %s205 = sand.u32 %s65, 1
        %s206 = smul.addr %s205, 64
        %s207 = scalar_lea.vmem [#allocation7], %s206
        // Predicated region
        $region37: #{tpu_custom_call.1} parent=31 // pred_check
          %p208 = pneg %p78
        $region38: #{tpu_custom_call.1} parent=31 // pred_check_branch
          %210 = sbr.rel (%p208) target = $region40
        $region39: #{tpu_custom_call.1} parent=31 // pred_region
          %211 = dma.done %s204, 1024
        $region40: #{tpu_custom_call.1} parent=31 // pred_fallthru
          _
        %p212 = pneg %p52
        %p213 = pneg %p49
        %s214 = sand.u32 %s65, 1
        %s215 = scalar_lea.sflag [#allocation8], %s214
        %s216 = sand.u32 %s65, 1
        %s217 = smul.addr %s216, 64
        %s218 = scalar_lea.vmem [#allocation7], %s217
        %p219 = pneg %p78
        %p220 = pneg %p75
        %p221 = scmp.lt.s32.totalorder %s24, 3
        %s222 = scalar_select %p221, %s24, 3
        %s223 = scalar_lea.vmem %s2, %s222
        %p224 = pneg %p104
        %p225 = pneg %p101
        %p226 = pneg %p130
        %p227 = pneg %p127
        %s228 = smul.u32 2, %s23
        %s229 = smul.u32 16, %s24
        %p230 = scmp.lt.s32.totalorder %s24, 3
        %s231 = scalar_select %p230, %s24, 3
        %s232 = scalar_lea.vmem %s2, %s231
        %s233 = smul.u32 2, %s23
        %p235 = scmp.eq.s32.totalorder %s24, 0
        // Predicated region
        $region41: #{tpu_custom_call.1} parent=31 // pred_check
          %p236 = pneg %p235
        $region42: #{tpu_custom_call.1} parent=31 // pred_check_branch
          %238 = sbr.rel (%p236) target = $region44
        $region43: #{tpu_custom_call.1} parent=31 // pred_region
          %vm239 = vcmask 7168
          %240 = vst.msk [vmem:[#allocation2] sm:$0xff] %vm239, -inf
          %241 = vst.msk [vmem:[#allocation2 + $0x8] sm:$0xff] %vm239, -inf
          %242 = vst.msk [vmem:[#allocation3] sm:$0xff] %vm239, 0.0
          %243 = vst.msk [vmem:[#allocation3 + $0x8] sm:$0xff] %vm239, 0.0
        $region44: #{tpu_custom_call.1} parent=31 // pred_fallthru
          _
        %v244 = vld [vmem:[#allocation4] sm:$0xf]
        %v245 = vld [vmem:[#allocation4 + $0x4] sm:$0xf]
        %v246 = vld [vmem:[%s207] sm:$0xf]
        %v247 = vld [vmem:[%s207 + $0x4] sm:$0xf]
        %v248 = vld [vmem:[%s207 + $0x8] sm:$0xf]
        %v249 = vld [vmem:[%s207 + $0xc] sm:$0xf]
        %v250 = vld [vmem:[%s207 + $0x10] sm:$0xf]
        %v251 = vld [vmem:[%s207 + $0x14] sm:$0xf]
        %v252 = vld [vmem:[%s207 + $0x18] sm:$0xf]
        %v253 = vld [vmem:[%s207 + $0x1c] sm:$0xf]
        %v254 = vld [vmem:[%s207 + $0x20] sm:$0xf]
        %v255 = vld [vmem:[%s207 + $0x24] sm:$0xf]
        %v256 = vld [vmem:[%s207 + $0x28] sm:$0xf]
        %v257 = vld [vmem:[%s207 + $0x2c] sm:$0xf]
        %v258 = vld [vmem:[%s207 + $0x30] sm:$0xf]
        %v259 = vld [vmem:[%s207 + $0x34] sm:$0xf]
        %v260 = vld [vmem:[%s207 + $0x38] sm:$0xf]
        %v261 = vld [vmem:[%s207 + $0x3c] sm:$0xf]
        %v262 = vld [vmem:[%s232] sm:$0x1]
        %v264 = vlaneseq
        %v265 = vshrl.u32 %v264, 7
        %v266 = vsub.s32 0, %v265
        %v267 = vrot.slane %v262, %v266
        %v271 = vunpack.c.l.b16 %v244
        %v272 = vunpack.c.l.b16 %v245
        %v273 = vpack.c.b16 %v272, %v271
        %v291 = vunpack.c.l.b16 %v246
        %v292 = vunpack.c.l.b16 %v247
        %v293 = vunpack.c.l.b16 %v248
        %v294 = vunpack.c.l.b16 %v249
        %v295 = vunpack.c.l.b16 %v250
        %v296 = vunpack.c.l.b16 %v251
        %v297 = vunpack.c.l.b16 %v252
        %v298 = vunpack.c.l.b16 %v253
        %v299 = vunpack.c.l.b16 %v254
        %v300 = vunpack.c.l.b16 %v255
        %v301 = vunpack.c.l.b16 %v256
        %v302 = vunpack.c.l.b16 %v257
        %v303 = vunpack.c.l.b16 %v258
        %v304 = vunpack.c.l.b16 %v259
        %v305 = vunpack.c.l.b16 %v260
        %v306 = vunpack.c.l.b16 %v261
        %v307 = vpack.c.b16 %v292, %v291
        %v308 = vpack.c.b16 %v294, %v293
        %v309 = vpack.c.b16 %v296, %v295
        %v310 = vpack.c.b16 %v298, %v297
        %v311 = vpack.c.b16 %v300, %v299
        %v312 = vpack.c.b16 %v302, %v301
        %v313 = vpack.c.b16 %v304, %v303
        %v314 = vpack.c.b16 %v306, %v305
        %323 = vmatprep.subr.bf16.mxu0 0
        %324 = vmatpush1.bf16.xpose.msra.mxu0 %v307
        %325 = vmatprep.subr.bf16.mxu0 0
        %326 = vmatpush1.bf16.xpose.msra.mxu0 %v308
        %327 = vmatprep.subr.bf16.mxu0 0
        %328 = vmatpush1.bf16.xpose.msra.mxu0 %v309
        %329 = vmatprep.subr.bf16.mxu0 0
        %330 = vmatpush1.bf16.xpose.msra.mxu0 %v310
        %331 = vmatprep.subr.bf16.mxu0 0
        %332 = vmatpush1.bf16.xpose.msra.mxu0 %v311
        %333 = vmatprep.subr.bf16.mxu0 0
        %334 = vmatpush1.bf16.xpose.msra.mxu0 %v312
        %335 = vmatprep.subr.bf16.mxu0 0
        %336 = vmatpush1.bf16.xpose.msra.mxu0 %v313
        %337 = vmatprep.subr.bf16.mxu0 0
        %338 = vmatpush1.bf16.xpose.msra.mxu0 %v314
        %339 = vmatprep.subr.bf16.mxu0 0
        %340 = vmatpush1.bf16.xpose.msra.mxu0 0
        %341 = vmatprep.subr.bf16.mxu0 0
        %342 = vmatpush1.bf16.xpose.msra.mxu0 0
        %343 = vmatprep.subr.bf16.mxu0 0
        %344 = vmatpush1.bf16.xpose.msra.mxu0 0
        %345 = vmatprep.subr.bf16.mxu0 0
        %346 = vmatpush1.bf16.xpose.msra.mxu0 0
        %347 = vmatprep.subr.bf16.mxu0 0
        %348 = vmatpush1.bf16.xpose.msra.mxu0 0
        %349 = vmatprep.subr.bf16.mxu0 0
        %350 = vmatpush1.bf16.xpose.msra.mxu0 0
        %351 = vmatprep.subr.bf16.mxu0 0
        %352 = vmatpush1.bf16.xpose.msra.mxu0 0
        %353 = vmatprep.subr.bf16.mxu0 0
        %354 = vmatpush1.bf16.xpose.msra.mxu0 0
        %355 = vmatprep.mubr.bf16.mxu0 0
        %356 = vmatmul.mubr.bf16.gmra.mrb[0].mxu0 %v273
        %v357 = vpop.f32.mrb[0].mxu0
        %v358 = vadd.f32 %v267, %v357
        %v359 = vpop.f32.mrb[0].mxu0
        %v360 = vpop.f32.mrb[0].mxu0
        %v361 = vadd.f32 %v267, %v360
        %v362 = vpop.f32.mrb[0].mxu0
        %363 = vdwg.mxu0
        %v364 = vld [vmem:[#allocation2] sm:$0xff]
        %v365 = vld [vmem:[#allocation2 + $0x8] sm:$0xff]
        %366 = vmax.xlane.f32.xlu0 %v358
        %v367 = vpop.xlane.xlu0 %366
        %368 = vmax.xlane.f32.xlu0 %v361
        %v369 = vpop.xlane.xlu0 %368
        %v370 = vmax.f32 %v364, %v367
        %v371 = vmax.f32 %v365, %v369
        %v372 = vld [vmem:[#allocation3] sm:$0xff]
        %v373 = vld [vmem:[#allocation3 + $0x8] sm:$0xff]
        %v374 = vsub.f32 %v364, %v370
        %v375 = vsub.f32 %v365, %v371
        %v376 = vmul.f32 %v374, 1.442695
        %v377 = vpow.pop %v376
        %v378 = vmul.f32 %v375, 1.442695
        %v379 = vpow.pop %v378
        %v380 = vmul.f32 %v372, %v377
        %v381 = vmul.f32 %v373, %v379
        %383 = vset.pattern.permute.xlu0 0
        %384 = vperm.xlu0 %383, %v370
        %v385 = vpop.permute.xlu0 %384
        %388 = vset.pattern.permute.xlu0 0
        %389 = vperm.xlu0 %388, %v371
        %v390 = vpop.permute.xlu0 %389
        %v392 = vsub.f32 %v358, %v385
        %v393 = vsub.f32 %v361, %v390
        %v394 = vmul.f32 %v392, 1.442695
        %v395 = vpow.pop %v394
        %v396 = vmul.f32 %v393, 1.442695
        %v397 = vpow.pop %v396
        %398 = vadd.xlane.f32.xlu0 %v395
        %v399 = vpop.xlane.xlu0 %398
        %400 = vadd.xlane.f32.xlu0 %v397
        %v401 = vpop.xlane.xlu0 %400
        %v402 = vadd.f32 %v380, %v399
        %v403 = vadd.f32 %v381, %v401
        %vm404 = vcmask 7168
        %405 = vst.msk [vmem:[#allocation3] sm:$0xff] %vm404, %v402
        %406 = vst.msk [vmem:[#allocation3 + $0x8] sm:$0xff] %vm404, %v403
        %407 = vst.msk [vmem:[#allocation2] sm:$0xff] %vm404, %v370
        %408 = vst.msk [vmem:[#allocation2 + $0x8] sm:$0xff] %vm404, %v371
        %s409 = smul.u32 %s24, 128
        %s410 = sshra.s32 %s409, 7
        %s411 = sand.u32 %s409, 127
        %s412 = smul.addr %s410, 8
        %s413 = scalar_lea.vmem [#allocation9], %s412
        %414 = vst [vmem:[%s413] sm:$0xff] %v358
        %415 = vst [vmem:[%s413 + $0x20] sm:$0xff] %v361
        %p416 = scmp.eq.s32.totalorder %s24, 3
        // Predicated region
        $region45: #{tpu_custom_call.1} parent=31 // pred_check
          %p417 = pneg %p416
        $region46: #{tpu_custom_call.1} parent=31 // pred_check_branch
          %419 = sbr.rel (%p417) target = $region48
        $region47: #{tpu_custom_call.1} parent=31 // pred_region
          %v420 = vld [vmem:[#allocation2] sm:$0xff]
          %v421 = vld [vmem:[#allocation2 + $0x8] sm:$0xff]
          %v422 = vld [vmem:[#allocation3] sm:$0xff]
          %v423 = vld [vmem:[#allocation3 + $0x8] sm:$0xff]
          %v424 = vlog2.pop %v422
          %v425 = vmul.f32 %v424, 0.6931472
          %v426 = vlog2.pop %v423
          %v427 = vmul.f32 %v426, 0.6931472
          %v428 = vadd.f32 %v420, %v425
          %v429 = vadd.f32 %v421, %v427
          %v430 = vld [vmem:[#allocation9] sm:$0xff]
          %v431 = vld [vmem:[#allocation9 + $0x8] sm:$0xff]
          %v432 = vld [vmem:[#allocation9 + $0x10] sm:$0xff]
          %v433 = vld [vmem:[#allocation9 + $0x18] sm:$0xff]
          %v434 = vld [vmem:[#allocation9 + $0x20] sm:$0xff]
          %v435 = vld [vmem:[#allocation9 + $0x28] sm:$0xff]
          %v436 = vld [vmem:[#allocation9 + $0x30] sm:$0xff]
          %v437 = vld [vmem:[#allocation9 + $0x38] sm:$0xff]
          %439 = vset.pattern.permute.xlu0 0
          %440 = vperm.xlu0 %439, %v428
          %v441 = vpop.permute.xlu0 %440
          %444 = vset.pattern.permute.xlu0 0
          %445 = vperm.xlu0 %444, %v429
          %v446 = vpop.permute.xlu0 %445
          %v448 = vsub.f32 %v430, %v441
          %v449 = vsub.f32 %v431, %v441
          %v450 = vsub.f32 %v432, %v441
          %v451 = vsub.f32 %v433, %v441
          %v452 = vsub.f32 %v434, %v446
          %v453 = vsub.f32 %v435, %v446
          %v454 = vsub.f32 %v436, %v446
          %v455 = vsub.f32 %v437, %v446
          %456 = vst [vmem:[#allocation9] sm:$0xff] %v448
          %457 = vst [vmem:[#allocation9 + $0x8] sm:$0xff] %v449
          %458 = vst [vmem:[#allocation9 + $0x10] sm:$0xff] %v450
          %459 = vst [vmem:[#allocation9 + $0x18] sm:$0xff] %v451
          %460 = vst [vmem:[#allocation9 + $0x20] sm:$0xff] %v452
          %461 = vst [vmem:[#allocation9 + $0x28] sm:$0xff] %v453
          %462 = vst [vmem:[#allocation9 + $0x30] sm:$0xff] %v454
          %463 = vst [vmem:[#allocation9 + $0x38] sm:$0xff] %v455
        $region48: #{tpu_custom_call.1} parent=31 // pred_fallthru
          _
        // Predicated region
        $region49: #{tpu_custom_call.1} parent=31 // pred_check
          %p464 = pneg %p127
        $region50: #{tpu_custom_call.1} parent=31 // pred_check_branch
          %466 = sbr.rel (%p464) target = $region52
        $region51: #{tpu_custom_call.1} parent=31 // pred_region
          %s467 = smul.u32 2, %s23
          %s469 = ssub.s32 1024, 1024
          %470 = vsyncadd [#allocation6], %s469
          %s471 = smul.addr %s467, 4
          %s472 = smul.addr %s471, 128
          %s473 = scalar_lea.hbm %s3, %s472
          %s474 = sshll.u32 [#allocation9], 4
          %s475 = int_to_ptr.vmem [resolvable:$true] %s474
          %480 = dma.vmem_to_hbm [thread:$0]  %s475, 1024, %s473, [#allocation6], 512, 512, 32
        $region52: #{tpu_custom_call.1} parent=31 // pred_fallthru
          _
        // Predicated region
        $region53: #{tpu_custom_call.1} parent=31 // pred_check
          %p481 = pneg %p127
        $region54: #{tpu_custom_call.1} parent=31 // pred_check_branch
          %483 = sbr.rel (%p481) target = $region56
        $region55: #{tpu_custom_call.1} parent=31 // pred_region
          %484 = dma.done [#allocation6], 1024
        $region56: #{tpu_custom_call.1} parent=31 // pred_fallthru
          _
      $region32: #{tpu_custom_call.1} parent=5 // pred_fallthru
        _
      %p485 = scmp.le.s32.totalorder 2, %s14
      // Predicated region
      $region57: #{tpu_custom_call.1} parent=5 // pred_check
        %p486 = pneg %p485
      $region58: #{tpu_custom_call.1} parent=5 // pred_check_branch
        %488 = sbr.rel (%p486) target = $region60
      $region59: #{tpu_custom_call.1} parent=5 // pred_region
        %s489 = ssub.s32 %s14, 2
      $region60: #{tpu_custom_call.1} parent=5 // pred_fallthru
        _
    $region6: #{tpu_custom_call.1} parent=1 // loop_footer
      %s18 = sadd.s32 1, %s14
    $region7: #{tpu_custom_call.1} parent=1 // loop_footer_branch
      %13 = sbr.rel target = $region3
    $region8: #{tpu_custom_call.1} parent=1 // loop_exit
      _
    %490 = vsyncpa [#allocation5], 1
    %s491 = scalar_lea.sflag [#allocation5], 1
    %492 = vsyncpa %s491, 1
    %493 = vsyncpa [#allocation8], 1
    %s494 = scalar_lea.sflag [#allocation8], 1
    %495 = vsyncpa %s494, 1
    %496 = vsyncpa [#allocation6], 1
    %s497 = scalar_lea.sflag [#allocation6], 1
    %498 = vsyncpa %s497, 1

</llo_original>
